<compile_context>
chip_gen: v5e
topology: v5e:2x2
jax: 0.10.0
libtpu: 0.0.40
codegen_flags: <defaults>
</compile_context>

<pallas_src>
import functools

import jax
import jax.numpy as jnp
from jax.experimental import pallas as pl
from jax.experimental.pallas import tpu as pltpu


def _attention_kernel(q_ref, enc_ref, ctx_ref, attn_ref, *scratch):
    # q_ref    : (TB, H)      last-layer decoder hidden (query) rows
    # enc_ref  : (TB, TS, H)  encoder outputs tile
    # ctx_ref  : (TB, H)      context output (resident across the S grid axis)
    # attn_ref : (TB, TS)     attention weights tile
    # scratch  : optional (TB, H) f32 accumulator (only when output dtype != f32)
    si = pl.program_id(1)
    acc_ref = scratch[0] if scratch else ctx_ref

    @pl.when(si == 0)
    def _init():
        acc_ref[...] = jnp.zeros_like(acc_ref)

    q = q_ref[...].astype(jnp.float32)        # (TB, H)
    e = enc_ref[...].astype(jnp.float32)      # (TB, TS, H)

    # scores[b, s] = <q[b, :], e[b, s, :]> — lane (H) reduce, VPU/XLU (no MXU:
    # an M=1 matmul would waste the whole MXU weight path per tile).
    scores = jnp.sum(q[:, None, :] * e, axis=-1)          # (TB, TS) f32

    # nn.Softmax(dim=1) over the singleton axis of (B, 1, S): every element is
    # its own softmax group -> 1.0 for finite scores, NaN for non-finite.
    finite = jnp.abs(scores) < jnp.inf                     # False for +/-inf and NaN
    attn = jnp.where(finite, jnp.ones_like(scores), jnp.full_like(scores, jnp.nan))
    attn_ref[...] = attn.astype(attn_ref.dtype)

    # Partial context for this S tile: sum_s attn[b,s] * e[b,s,:] — sublane (TS)
    # reduce on VPU/XLU; multiply by attn keeps NaN propagation identical to the
    # reference matmul.
    acc_ref[...] += jnp.sum(attn[:, :, None] * e, axis=1).astype(acc_ref.dtype)

    if scratch:
        @pl.when(si == pl.num_programs(1) - 1)
        def _finalize():
            ctx_ref[...] = acc_ref[...].astype(ctx_ref.dtype)


@functools.lru_cache(maxsize=None)
def _hw_params():
    """(encoder-tile budget bytes, vmem_limit_bytes, min batch blocks) per chip."""
    vmem_cap = 64 * 1024 * 1024
    try:
        vmem_cap = int(pltpu.get_tpu_info().vmem_capacity_bytes)
    except Exception:
        pass
    num_cores = 1
    try:
        num_cores = int(getattr(jax.devices()[0], "num_cores", 1) or 1)
    except Exception:
        pass
    min_batch_blocks = 2 if num_cores >= 2 else 1
    if vmem_cap >= 96 * 1024 * 1024:
        # v5e / v6e: 128 MiB VMEM — spend it on big streaming tiles.
        return 12 * 1024 * 1024, 96 * 1024 * 1024, min_batch_blocks
    # v7x: 64 MiB physical VMEM (32 MiB scoped default) — keep headroom.
    return 5 * 1024 * 1024, 48 * 1024 * 1024, min_batch_blocks


def _pick_tiles(B, S, H, itemsize, budget_bytes, min_batch_blocks=1):
    """Choose (TB, TS):
       - TB divides B (multiple of 8, or TB == B),
       - TS divides S (multiple of 128, or TS == S),
       - encoder block TB*TS*H*itemsize stays under budget_bytes (it is
         double-buffered by the pipeline); prefer the largest that fits,
       - keep >= min_batch_blocks blocks on the parallel batch axis when
         possible (megacore: v7x has 2 TensorCores)."""
    def options(n, unit, cap):
        opts = {n}
        t = unit
        while t <= min(n - 1, cap):
            if n % t == 0:
                opts.add(t)
            t += unit
        return sorted(opts)

    tb_opts = options(B, 8, 256)
    if min_batch_blocks > 1:
        constrained = [t for t in tb_opts if B // t >= min_batch_blocks]
        if constrained:
            tb_opts = constrained
    ts_opts = options(S, 128, 8192)

    fits = [(tb * ts, tb, ts)
            for tb in tb_opts for ts in ts_opts
            if tb * ts * H * itemsize <= budget_bytes]
    if fits:
        _, tb, ts = max(fits)
        return tb, ts
    return min(tb_opts), min(ts_opts)


@jax.jit
def attention_forward(decoder_hidden, encoder_outputs):
    """decoder_hidden: (L, B, H), encoder_outputs: (B, S, H)
       -> (context (B, 1, H), attention (B, 1, S))."""
    L, B, H = decoder_hidden.shape
    _, S, _ = encoder_outputs.shape
    dtype = encoder_outputs.dtype
    itemsize = jnp.dtype(dtype).itemsize

    budget_bytes, vmem_limit, min_batch_blocks = _hw_params()
    TB, TS = _pick_tiles(B, S, H, itemsize, budget_bytes, min_batch_blocks)
    grid = (B // TB, S // TS)

    # Squeezed (B, H) query slab; outputs produced as dense (B, H) / (B, S)
    # slabs and reshaped back to the module's (B, 1, *) layout in the wrapper.
    query = decoder_hidden[-1]                               # (B, H)

    # f32 outputs accumulate directly into the resident ctx block; otherwise
    # use a small f32 scratch accumulator.
    use_scratch = dtype != jnp.float32
    scratch_shapes = [pltpu.VMEM((TB, H), jnp.float32)] if use_scratch else []

    grid_spec = pltpu.PrefetchScalarGridSpec(
        num_scalar_prefetch=0,
        grid=grid,
        in_specs=[
            pl.BlockSpec((TB, H), lambda bi, si: (bi, 0)),
            # TODO(synk): if production H < 128, fold H into the lane axis
            # ((S, H) -> (S*H/128, 128)) in the wrapper for full lane density.
            pl.BlockSpec((TB, TS, H), lambda bi, si: (bi, si, 0)),
        ],
        out_specs=[
            pl.BlockSpec((TB, H), lambda bi, si: (bi, 0)),    # context (resident over si)
            pl.BlockSpec((TB, TS), lambda bi, si: (bi, si)),  # attention weights
        ],
        scratch_shapes=scratch_shapes,
    )

    context2d, attention2d = pl.pallas_call(
        _attention_kernel,
        out_shape=(
            jax.ShapeDtypeStruct((B, H), dtype),
            jax.ShapeDtypeStruct((B, S), dtype),
        ),
        grid_spec=grid_spec,
        compiler_params=pltpu.CompilerParams(
            dimension_semantics=("parallel", "arbitrary"),
            vmem_limit_bytes=vmem_limit,
        ),
        cost_estimate=pl.CostEstimate(
            flops=4 * B * S * H,
            transcendentals=0,
            bytes_accessed=itemsize * (B * H + B * S * H + B * H + B * S),
        ),
    )(query, encoder_outputs)

    return context2d[:, None, :], attention2d[:, None, :]


def _reference(decoder_hidden, encoder_outputs):
    # Pure-JAX reference mirroring the PyTorch code exactly.
    hidden_last = decoder_hidden[-1, :, :][None]                     # (1, B, H)
    att = jnp.matmul(jnp.transpose(hidden_last, (1, 0, 2)),
                     jnp.transpose(encoder_outputs, (0, 2, 1)))      # (B, 1, S)
    att = jax.nn.softmax(att, axis=1)                                # dim=1 (singleton)
    ctx = jnp.matmul(att, encoder_outputs)                           # (B, 1, H)
    return ctx, att


if __name__ == "__main__":
    key = jax.random.PRNGKey(0)
    k1, k2 = jax.random.split(key)

    L, B, S, H = 3, 2, 8, 32
    decoder_hidden = jax.random.normal(k1, (L, B, H), dtype=jnp.float32)
    encoder_outputs = jax.random.normal(k2, (B, S, H), dtype=jnp.float32)

    ctx, attn = attention_forward(decoder_hidden, encoder_outputs)
    jax.block_until_ready((ctx, attn))

    ctx_ref, attn_ref = _reference(decoder_hidden, encoder_outputs)
    assert ctx.shape == (B, 1, H) and attn.shape == (B, 1, S)
    assert jnp.allclose(ctx, ctx_ref, atol=1e-5, rtol=1e-5), "context mismatch"
    assert jnp.allclose(attn, attn_ref, atol=1e-6, rtol=1e-6), "attention mismatch"

    print("KERNEL_OK")
</pallas_src>

<mosaic_0001>
module attributes {stable_mosaic.version = 11 : i64} {
  func.func @_attention_kernel(%arg0: i32, %arg1: i32, %arg2: memref<2x32xf32, #tpu.memory_space<vmem>>, %arg3: memref<2x8x32xf32, #tpu.memory_space<vmem>>, %arg4: memref<2x32xf32, #tpu.memory_space<vmem>>, %arg5: memref<2x8xf32, #tpu.memory_space<vmem>>) attributes {dimension_semantics = [#tpu.dimension_semantics<parallel>, #tpu.dimension_semantics<arbitrary>], iteration_bounds = array<i64: 1, 1>, scalar_prefetch = 0 : i64, scratch_operands = 0 : i64, tpu.core_type = #tpu.core_type<tc>, window_params = [{transform_indices = @transform_0, window_bounds = array<i64: 2, 32>}, {transform_indices = @transform_1, window_bounds = array<i64: 2, 8, 32>}, {transform_indices = @transform_2, window_bounds = array<i64: 2, 32>}, {transform_indices = @transform_3, window_bounds = array<i64: 2, 8>}]} {
    %c0_i32 = arith.constant 0 : i32
    %0 = arith.cmpi eq, %arg1, %c0_i32 : i32
    %1 = arith.extui %0 : i1 to i32
    %c0_i32_0 = arith.constant 0 : i32
    %2 = arith.cmpi ne, %1, %c0_i32_0 : i32
    scf.if %2 {
      %cst_15 = arith.constant 0.000000e+00 : f32
      %23 = vector.broadcast %cst_15 : f32 to vector<2x32xf32>
      %c0_16 = arith.constant 0 : index
      %c0_17 = arith.constant 0 : index
      %24 = vector.load %arg4[%c0_16, %c0_17] : memref<2x32xf32, #tpu.memory_space<vmem>>, vector<2x32xf32>
      tpu.vector_store %arg4[%c0_16, %c0_17], %23 {strides = array<i32>} : memref<2x32xf32, #tpu.memory_space<vmem>>, vector<2x32xf32>,
    } else {
    }
    %c0 = arith.constant 0 : index
    %c0_1 = arith.constant 0 : index
    %3 = vector.load %arg2[%c0, %c0_1] : memref<2x32xf32, #tpu.memory_space<vmem>>, vector<2x32xf32>
    %c0_2 = arith.constant 0 : index
    %c0_3 = arith.constant 0 : index
    %c0_4 = arith.constant 0 : index
    %4 = vector.load %arg3[%c0_2, %c0_3, %c0_4] : memref<2x8x32xf32, #tpu.memory_space<vmem>>, vector<2x8x32xf32>
    %5 = vector.shape_cast %3 : vector<2x32xf32> to vector<2x1x32xf32>
    %6 = vector.broadcast %5 : vector<2x1x32xf32> to vector<2x8x32xf32>
    %7 = arith.mulf %6, %4 : vector<2x8x32xf32>
    %cst = arith.constant dense<0.000000e+00> : vector<2x8xf32>
    %8 = vector.multi_reduction <add>, %7, %cst [2] : vector<2x8x32xf32> to vector<2x8xf32>
    %9 = math.absf %8 : vector<2x8xf32>
    %cst_5 = arith.constant 0x7F800000 : f32
    %10 = vector.broadcast %cst_5 : f32 to vector<2x8xf32>
    %11 = arith.cmpf olt, %9, %10 : vector<2x8xf32>
    %cst_6 = arith.constant 1.000000e+00 : f32
    %12 = vector.broadcast %cst_6 : f32 to vector<2x8xf32>
    %cst_7 = arith.constant 0x7FC00000 : f32
    %13 = vector.broadcast %cst_7 : f32 to vector<2x8xf32>
    %14 = arith.select %11, %12, %13 : vector<2x8xi1>, vector<2x8xf32>
    %c0_8 = arith.constant 0 : index
    %c0_9 = arith.constant 0 : index
    %15 = vector.load %arg5[%c0_8, %c0_9] : memref<2x8xf32, #tpu.memory_space<vmem>>, vector<2x8xf32>
    tpu.vector_store %arg5[%c0_8, %c0_9], %14 {strides = array<i32>} : memref<2x8xf32, #tpu.memory_space<vmem>>, vector<2x8xf32>,
    %c0_10 = arith.constant 0 : index
    %c0_11 = arith.constant 0 : index
    %16 = vector.load %arg4[%c0_10, %c0_11] : memref<2x32xf32, #tpu.memory_space<vmem>>, vector<2x32xf32>
    %17 = vector.shape_cast %14 : vector<2x8xf32> to vector<2x8x1xf32>
    %18 = vector.broadcast %17 : vector<2x8x1xf32> to vector<2x8x32xf32>
    %19 = arith.mulf %18, %4 : vector<2x8x32xf32>
    %cst_12 = arith.constant dense<0.000000e+00> : vector<2x32xf32>
    %20 = vector.multi_reduction <add>, %19, %cst_12 [1] : vector<2x8x32xf32> to vector<2x32xf32>
    %21 = arith.addf %16, %20 : vector<2x32xf32>
    %c0_13 = arith.constant 0 : index
    %c0_14 = arith.constant 0 : index
    %22 = vector.load %arg4[%c0_13, %c0_14] : memref<2x32xf32, #tpu.memory_space<vmem>>, vector<2x32xf32>
    tpu.vector_store %arg4[%c0_13, %c0_14], %21 {strides = array<i32>} : memref<2x32xf32, #tpu.memory_space<vmem>>, vector<2x32xf32>,
    return
  }
  func.func @transform_0(%arg0: i32, %arg1: i32) -> (i32, i32) {
    %c0_i32 = arith.constant 0 : i32
    %c0_i32_0 = arith.constant 0 : i32
    return %arg0, %c0_i32 : i32, i32
  }
  func.func @transform_1(%arg0: i32, %arg1: i32) -> (i32, i32, i32) {
    %c0_i32 = arith.constant 0 : i32
    %c0_i32_0 = arith.constant 0 : i32
    return %arg0, %arg1, %c0_i32 : i32, i32, i32
  }
  func.func @transform_2(%arg0: i32, %arg1: i32) -> (i32, i32) {
    %c0_i32 = arith.constant 0 : i32
    %c0_i32_0 = arith.constant 0 : i32
    return %arg0, %c0_i32 : i32, i32
  }
  func.func @transform_3(%arg0: i32, %arg1: i32) -> (i32, i32) {
    %c0_i32 = arith.constant 0 : i32
    return %arg0, %arg1 : i32, i32
  }
}

</mosaic_0001>

<llo_original>
// kernel: attention_forward.1
$region0: #{attention_forward.1}
  #allocation0 [shape = 'u32[]', space=smem, size = 0x4, offset = 0x4, fixed_abs, tag = 'smem constant byte address 0x4 - core index']
  #allocation1 [shape = 'u32[72,128]{1,0:T(1,128)}', space=vmem, size = 0x9000, scoped, tag = 'internal scratch']
  %s0 = inlined_call_operand.vmem [shape: f32[2,32], index: 0, kind: input, shape index: {}]
  %s1 = inlined_call_operand.hbm [shape: f32[2,8,32], index: 1, kind: input, shape index: {}]
  %s2 = inlined_call_operand.hbm [shape: f32[2,32], index: 2, kind: output, shape index: {0}]
  %s3 = inlined_call_operand.hbm [shape: f32[2,8], index: 3, kind: output, shape index: {1}]
  %4 = xla_tuple %s2, %s3
  %s5 = sld [smem:[#allocation0]]
  $region34: #{attention_forward.1} parent=0
    _
  %s7 = ssub.s32 1, %s5
  %s8 = scalar_select 0, %s7, %s5
  $region1: #{attention_forward.1} parent=0
    #allocation2 [shape = 'u8[8192]{0}', space=vmem, size = 0x2000, scoped, tag = 'input window, operand 1, single buffered']
    #allocation3 [shape = 's32[1]{0}', space=sflag, size = 0x4, scoped, tag = 'scoped memory for attention_forward.1']
    #allocation4 [shape = 's32[1]{0}', space=sflag, size = 0x4, scoped, tag = 'scoped memory for attention_forward.1']
    #allocation5 [shape = 'u8[1024]{0}', space=vmem, size = 0x400, scoped, tag = 'output window, operand 0, single buffered']
    #allocation6 [shape = 'u8[1024]{0}', space=vmem, size = 0x400, scoped, tag = 'output window, operand 1, single buffered']
    #allocation7 [shape = 's32[1]{0}', space=sflag, size = 0x4, scoped, tag = 'scoped memory for attention_forward.1']
    %9 = vsyncpa [#allocation3], 0
    %10 = vsyncpa [#allocation4], 0
    %11 = vsyncpa [#allocation7], 0
    // Predicated region
    $region2: #{attention_forward.1} parent=1 // pred_check
      _
    $region3: #{attention_forward.1} parent=1 // pred_check_branch
      %13 = sbr.rel (0) target = $region5
    $region4: #{attention_forward.1} parent=1 // pred_region
      _
    $region5: #{attention_forward.1} parent=1 // pred_fallthru
      _
    // Predicated region
    $region6: #{attention_forward.1} parent=1 // pred_check
      _
    $region7: #{attention_forward.1} parent=1 // pred_check_branch
      %15 = sbr.rel (0) target = $region9
    $region8: #{attention_forward.1} parent=1 // pred_region
      %17 = vsyncadd [#allocation3], 0
      %s18 = sshll.u32 %s1, 4
      %s19 = int_to_ptr.hbm [resolvable:$true] %s18
      %s20 = sshll.u32 [#allocation2], 4
      %s21 = int_to_ptr.vmem [resolvable:$true] %s20
      %26 = dma.hbm_to_vmem [thread:$0]  %s19, 256, %s21, [#allocation3], 128, 128, 8
    $region9: #{attention_forward.1} parent=1 // pred_fallthru
      _
    // Predicated region
    $region10: #{attention_forward.1} parent=1 // pred_check
      _
    $region11: #{attention_forward.1} parent=1 // pred_check_branch
      %28 = sbr.rel (0) target = $region13
    $region12: #{attention_forward.1} parent=1 // pred_region
      %30 = dma.done [#allocation3], 256
    $region13: #{attention_forward.1} parent=1 // pred_fallthru
      _
    %p31 = scmp.eq.s32.totalorder 0, 0
    // Predicated region
    $region14: #{attention_forward.1} parent=1 // pred_check
      %p32 = pneg %p31
    $region15: #{attention_forward.1} parent=1 // pred_check_branch
      %34 = sbr.rel (%p32) target = $region17
    $region16: #{attention_forward.1} parent=1 // pred_region
      %vm35 = vcmask 254976
      %36 = vst.msk [vmem:[#allocation5] sm:$0x3] %vm35, 0.0
    $region17: #{attention_forward.1} parent=1 // pred_fallthru
      _
    %v37 = vld [vmem:[%s0] sm:$0x3]
    %v38 = vld [vmem:[#allocation2] sm:$0xff]
    %v39 = vld [vmem:[#allocation2 + $0x8] sm:$0xff]
    %v41 = vrot.slane %v37, 1
    %v42 = vperm.slane %v37, 0
    %v43 = vperm.slane %v41, 0
    %v46 = vmul.f32 %v42, %v38
    %v47 = vmul.f32 %v43, %v39
    %vm48 = vcmask 261120
    %v49 = vsel %vm48, %v46, 0.0
    %50 = vadd.xlane.f32.xlu0 %v49
    %v51 = vpop.xlane.xlu0 %50
    %v52 = vsel %vm48, %v47, 0.0
    %53 = vadd.xlane.f32.xlu0 %v52
    %v54 = vpop.xlane.xlu0 %53
    %v55 = vand.u32 2147483647, %v51
    %v56 = vand.u32 2147483647, %v54
    %vm57 = vcmp.lt.f32.partialorder %v55, inf
    %vm58 = vcmp.lt.f32.partialorder %v56, inf
    %v59 = vsel %vm57, 1.0, nan
    %v60 = vsel %vm58, 1.0, nan
    %v63 = vlaneseq
    %v64 = vand.u32 %v63, 127
    %v65 = vperm.slane %v59, %v64
    %v66 = vperm.slane %v60, %v64
    %vm67 = vcmask 1041409
    %v68 = vsel %vm67, %v66, %v65
    %vm70 = vcmask 58368
    %71 = vst.msk [vmem:[#allocation6] sm:$0x3] %vm70, %v68
    %v72 = vld [vmem:[#allocation5] sm:$0x3]
    %v73 = vmul.f32 %v59, %v38
    %v74 = vmul.f32 %v60, %v39
    %v75 = vsel %vm48, %v73, 0.0
    %v76 = vrot.slane %v75, 4
    %v77 = vadd.f32 %v75, %v76
    %v78 = vrot.slane %v77, 2
    %v79 = vadd.f32 %v77, %v78
    %v80 = vrot.slane %v79, 1
    %v81 = vadd.f32 %v79, %v80
    %v82 = vsel %vm48, %v74, 0.0
    %v83 = vrot.slane %v82, 4
    %v84 = vadd.f32 %v82, %v83
    %v85 = vrot.slane %v84, 2
    %v86 = vadd.f32 %v84, %v85
    %v87 = vrot.slane %v86, 1
    %v88 = vadd.f32 %v86, %v87
    %v91 = vsel %vm67, %v88, %v81
    %v93 = vadd.f32 %v72, %v91
    %vm94 = vcmask 254976
    %95 = vst.msk [vmem:[#allocation5] sm:$0x3] %vm94, %v93
    // Predicated region
    $region18: #{attention_forward.1} parent=1 // pred_check
      _
    $region19: #{attention_forward.1} parent=1 // pred_check_branch
      %97 = sbr.rel (0) target = $region21
    $region20: #{attention_forward.1} parent=1 // pred_region
      %99 = vsyncadd [#allocation4], 0
      %s101 = sshll.u32 [#allocation5], 4
      %s102 = int_to_ptr.vmem [resolvable:$true] %s101
      %s103 = sshll.u32 %s2, 4
      %s104 = int_to_ptr.hbm [resolvable:$true] %s103
      %106 = dma.vmem_to_hbm [thread:$0]  %s102, 32, %s104, [#allocation4]
    $region21: #{attention_forward.1} parent=1 // pred_fallthru
      _
    // Predicated region
    $region22: #{attention_forward.1} parent=1 // pred_check
      _
    $region23: #{attention_forward.1} parent=1 // pred_check_branch
      %108 = sbr.rel (0) target = $region25
    $region24: #{attention_forward.1} parent=1 // pred_region
      %110 = vsyncadd [#allocation7], 0
      %s112 = sshll.u32 [#allocation6], 4
      %s113 = int_to_ptr.vmem [resolvable:$true] %s112
      %s114 = sshll.u32 %s3, 4
      %s115 = int_to_ptr.hbm [resolvable:$true] %s114
      %117 = dma.vmem_to_hbm [thread:$0]  %s113, 32, %s115, [#allocation7]
    $region25: #{attention_forward.1} parent=1 // pred_fallthru
      _
    // Predicated region
    $region26: #{attention_forward.1} parent=1 // pred_check
      _
    $region27: #{attention_forward.1} parent=1 // pred_check_branch
      %119 = sbr.rel (0) target = $region29
    $region28: #{attention_forward.1} parent=1 // pred_region
      %121 = dma.done [#allocation4], 32
    $region29: #{attention_forward.1} parent=1 // pred_fallthru
      _
    // Predicated region
    $region30: #{attention_forward.1} parent=1 // pred_check
      _
    $region31: #{attention_forward.1} parent=1 // pred_check_branch
      %123 = sbr.rel (0) target = $region33
    $region32: #{attention_forward.1} parent=1 // pred_region
      %125 = dma.done [#allocation7], 32
    $region33: #{attention_forward.1} parent=1 // pred_fallthru
      _
    %126 = vsyncpa [#allocation3], 1
    %127 = vsyncpa [#allocation4], 1
    %128 = vsyncpa [#allocation7], 1

</llo_original>
